<compile_context>
chip_gen: v6e
topology: v6e:2x2x1
jax: 0.10.0
libtpu: 0.0.40
codegen_flags: <defaults>
</compile_context>

<pallas_src>
import jax
import jax.numpy as jnp
from jax.experimental import pallas as pl
from jax.experimental.pallas import tpu as pltpu


def node_scorer_kernel(a_ref, x_ref, w1_ref, b1_ref, w2_ref, b2_ref,
                       scores_ref, feat_ref):
    a = a_ref[0]        # (M, M)   bf16 block-diagonal normalized adjacency
    x = x_ref[0]        # (M, Fin) bf16 packed node features (all graphs of this step)

    # GCNConv 1: A_hat @ (X @ W1) + b1, ReLU   (bf16 MXU operands, f32 accumulate)
    xw1 = jnp.dot(x, w1_ref[...], preferred_element_type=jnp.float32)
    h1 = jnp.dot(a, xw1.astype(jnp.bfloat16),
                 preferred_element_type=jnp.float32) + b1_ref[...]
    h1 = jnp.maximum(h1, 0.0)

    # GCNConv 2: A_hat @ (H1 @ W2) + b2, ReLU
    hw2 = jnp.dot(h1.astype(jnp.bfloat16), w2_ref[...],
                  preferred_element_type=jnp.float32)
    h2 = jnp.dot(a, hw2.astype(jnp.bfloat16),
                 preferred_element_type=jnp.float32) + b2_ref[...]
    h2 = jnp.maximum(h2, 0.0)                       # (M, Out) f32

    feat_ref[0] = h2                                # exact f32 node embeddings

    # fc: weight = ones(1, Out), bias = 0 -> per-node feature sum.  Computed as
    # a bf16 ones-row contracted against h2 on the MXU so the result lands
    # lane-dense as a (1, M) row (no (N,1) masked stores).
    h2b = h2.astype(jnp.bfloat16)
    ones_row = jnp.ones((1, h2b.shape[1]), jnp.bfloat16)
    scores_ref[0] = jax.lax.dot_general(
        ones_row, h2b,
        dimension_numbers=(((1,), (1,)), ((), ())),
        preferred_element_type=jnp.float32)         # (1, M)


def node_scorer(x_b, a_b, w1, b1, w2, b2, *, num_splits=2):
    """Batched NodeScorer forward.

    x_b: (B, N, Fin) node features, a_b: (B, N, N) GCN-normalized adjacency.
    Returns (scores (B, N), feats (B, N, Out)).
    """
    bsz, n, fin = x_b.shape
    hid = w1.shape[1]
    out_dim = w2.shape[1]

    if bsz % num_splits != 0:
        num_splits = 1
    gps = bsz // num_splits          # graphs per grid step
    m = gps * n                      # packed matmul M / lane dimension per step

    # Pack features: (B, N, Fin) -> (S, M, Fin), graphs of a split stacked row-wise.
    x_pk = x_b.reshape(num_splits, m, fin).astype(jnp.bfloat16)

    # Per-split block-diagonal adjacency: (S, gps, N, N) -> (S, M, M), bf16.
    a_split = a_b.reshape(num_splits, gps, n, n).astype(jnp.bfloat16)
    eye_g = jnp.eye(gps, dtype=jnp.bfloat16)
    a_blk = (a_split[:, :, :, None, :] *
             eye_g[None, :, None, :, None]).reshape(num_splits, m, m)

    w1_bf = w1.astype(jnp.bfloat16)
    w2_bf = w2.astype(jnp.bfloat16)

    scores3, feats3 = pl.pallas_call(
        node_scorer_kernel,
        out_shape=(
            jax.ShapeDtypeStruct((num_splits, 1, m), jnp.float32),        # lane-dense scores
            jax.ShapeDtypeStruct((num_splits, m, out_dim), jnp.float32),  # node embeddings
        ),
        grid=(num_splits,),
        in_specs=[
            pl.BlockSpec((1, m, m), lambda i: (i, 0, 0)),      # block-diag A_hat (per split)
            pl.BlockSpec((1, m, fin), lambda i: (i, 0, 0)),    # packed X         (per split)
            pl.BlockSpec((fin, hid), lambda i: (0, 0)),        # w1 (shared)
            pl.BlockSpec((1, hid), lambda i: (0, 0)),          # b1 (shared)
            pl.BlockSpec((hid, out_dim), lambda i: (0, 0)),    # w2 (shared)
            pl.BlockSpec((1, out_dim), lambda i: (0, 0)),      # b2 (shared)
        ],
        out_specs=(
            pl.BlockSpec((1, 1, m), lambda i: (i, 0, 0)),
            pl.BlockSpec((1, m, out_dim), lambda i: (i, 0, 0)),
        ),
        compiler_params=pltpu.CompilerParams(
            dimension_semantics=("parallel",)),
    )(a_blk, x_pk, w1_bf, b1, w2_bf, b2)

    scores = scores3.reshape(bsz, n)                # squeeze(dim=-1) equivalent
    feats = feats3.reshape(bsz, n, out_dim)
    return scores, feats


def build_norm_adj(edge_index, num_nodes):
    """Dense GCN-normalized adjacency: D^-1/2 (A + I) D^-1/2 (A[dst, src] = 1)."""
    src, dst = edge_index[0], edge_index[1]
    a = jnp.zeros((num_nodes, num_nodes), jnp.float32)
    a = a.at[dst, src].set(1.0)
    a = jnp.maximum(a, jnp.eye(num_nodes, dtype=jnp.float32))   # add self loops
    deg = a.sum(axis=1)
    d_inv_sqrt = 1.0 / jnp.sqrt(jnp.maximum(deg, 1.0))
    return d_inv_sqrt[:, None] * a * d_inv_sqrt[None, :]


def ring_edge_index(num_nodes, skip):
    """Deterministic bidirectional ring/chord graph, edge_index shape (2, E)."""
    idx = jnp.arange(num_nodes)
    nbr = (idx + skip) % num_nodes
    src = jnp.concatenate([idx, nbr])
    dst = jnp.concatenate([nbr, idx])
    return jnp.stack([src, dst], axis=0)


def ref_forward_single(x, a_hat, w1, b1, w2, b2):
    """Pure-JAX reference mimicking the kernel's bf16-input / f32-accum math."""
    xb = x.astype(jnp.bfloat16)
    ab = a_hat.astype(jnp.bfloat16)
    w1b = w1.astype(jnp.bfloat16)
    w2b = w2.astype(jnp.bfloat16)
    xw1 = jnp.dot(xb, w1b, preferred_element_type=jnp.float32)
    h1 = jnp.dot(ab, xw1.astype(jnp.bfloat16),
                 preferred_element_type=jnp.float32) + b1
    h1 = jnp.maximum(h1, 0.0)
    hw2 = jnp.dot(h1.astype(jnp.bfloat16), w2b,
                  preferred_element_type=jnp.float32)
    h2 = jnp.dot(ab, hw2.astype(jnp.bfloat16),
                 preferred_element_type=jnp.float32) + b2
    h2 = jnp.maximum(h2, 0.0)
    # fc(ones, 0): row-sum, with the kernel's bf16 rounding of h2 before the dot.
    scores = jnp.sum(h2.astype(jnp.bfloat16).astype(jnp.float32), axis=-1)
    return scores, h2


if __name__ == "__main__":
    # Small deterministic sizes; batch of graphs chosen so each of the 2 grid
    # steps packs M = 8 graphs * 16 nodes = 128 rows (full MXU / lane width).
    num_graphs = 16
    num_nodes = 16
    node_input_dim, hidden_dim, output_dim = 8, 32, 16

    key = jax.random.PRNGKey(0)
    kx, kw1, kw2 = jax.random.split(key, 3)

    # Node features for each graph.
    x_b = jax.random.normal(
        kx, (num_graphs, num_nodes, node_input_dim), jnp.float32)

    # One deterministic graph per batch element (ring with varying chord skip).
    a_hat_b = jnp.stack([
        build_norm_adj(
            ring_edge_index(num_nodes, (s % (num_nodes - 1)) + 1), num_nodes)
        for s in range(num_graphs)
    ])

    # GCNConv parameters (glorot-ish deterministic init, zero bias).
    w1 = jax.random.normal(kw1, (node_input_dim, hidden_dim), jnp.float32) * (
        1.0 / jnp.sqrt(node_input_dim))
    b1 = jnp.zeros((1, hidden_dim), jnp.float32)
    w2 = jax.random.normal(kw2, (hidden_dim, output_dim), jnp.float32) * (
        1.0 / jnp.sqrt(hidden_dim))
    b2 = jnp.zeros((1, output_dim), jnp.float32)
    # fc: weight = ones, bias = 0 (per reset_parameters) -> folded into the
    # kernel as a lane-dense bf16 ones-row reduction over output_dim.

    scores, feats = node_scorer(x_b, a_hat_b, w1, b1, w2, b2, num_splits=2)
    jax.block_until_ready((scores, feats))

    # Pure-JAX reference check (vmapped over the batch of graphs).
    scores_ref, feats_ref = jax.vmap(
        ref_forward_single, in_axes=(0, 0, None, None, None, None))(
            x_b, a_hat_b, w1, b1, w2, b2)

    assert scores.shape == (num_graphs, num_nodes)
    assert feats.shape == (num_graphs, num_nodes, output_dim)
    assert jnp.allclose(feats, feats_ref, atol=1e-2, rtol=1e-2), "feature mismatch"
    assert jnp.allclose(scores, scores_ref, atol=1e-2, rtol=1e-2), "score mismatch"

    print("KERNEL_OK")
</pallas_src>

<mosaic_0001>
module attributes {stable_mosaic.version = 11 : i64} {
  func.func @node_scorer_kernel(%arg0: i32, %arg1: memref<1x128x128xbf16, #tpu.memory_space<vmem>>, %arg2: memref<1x128x8xbf16, #tpu.memory_space<vmem>>, %arg3: memref<8x32xbf16, #tpu.memory_space<vmem>>, %arg4: memref<1x32xf32, #tpu.memory_space<vmem>>, %arg5: memref<32x16xbf16, #tpu.memory_space<vmem>>, %arg6: memref<1x16xf32, #tpu.memory_space<vmem>>, %arg7: memref<1x1x128xf32, #tpu.memory_space<vmem>>, %arg8: memref<1x128x16xf32, #tpu.memory_space<vmem>>) attributes {dimension_semantics = [#tpu.dimension_semantics<parallel>], iteration_bounds = array<i64: 2>, scalar_prefetch = 0 : i64, scratch_operands = 0 : i64, tpu.core_type = #tpu.core_type<tc>, window_params = [{transform_indices = @transform_0, window_bounds = array<i64: 1, 128, 128>}, {transform_indices = @transform_1, window_bounds = array<i64: 1, 128, 8>}, {pipeline_mode = #tpu.pipeline_mode<synchronous>, transform_indices = @transform_2, window_bounds = array<i64: 8, 32>}, {pipeline_mode = #tpu.pipeline_mode<synchronous>, transform_indices = @transform_3, window_bounds = array<i64: 1, 32>}, {pipeline_mode = #tpu.pipeline_mode<synchronous>, transform_indices = @transform_4, window_bounds = array<i64: 32, 16>}, {pipeline_mode = #tpu.pipeline_mode<synchronous>, transform_indices = @transform_5, window_bounds = array<i64: 1, 16>}, {transform_indices = @transform_6, window_bounds = array<i64: 1, 1, 128>}, {transform_indices = @transform_7, window_bounds = array<i64: 1, 128, 16>}]} {
    %c0 = arith.constant 0 : index
    %c0_0 = arith.constant 0 : index
    %c0_1 = arith.constant 0 : index
    %0 = vector.load %arg1[%c0, %c0_0, %c0_1] : memref<1x128x128xbf16, #tpu.memory_space<vmem>>, vector<1x128x128xbf16>
    %1 = vector.shape_cast %0 : vector<1x128x128xbf16> to vector<128x128xbf16>
    %c0_2 = arith.constant 0 : index
    %c0_3 = arith.constant 0 : index
    %c0_4 = arith.constant 0 : index
    %2 = vector.load %arg2[%c0_2, %c0_3, %c0_4] : memref<1x128x8xbf16, #tpu.memory_space<vmem>>, vector<1x128x8xbf16>
    %3 = vector.shape_cast %2 : vector<1x128x8xbf16> to vector<128x8xbf16>
    %c0_5 = arith.constant 0 : index
    %c0_6 = arith.constant 0 : index
    %4 = vector.load %arg3[%c0_5, %c0_6] : memref<8x32xbf16, #tpu.memory_space<vmem>>, vector<8x32xbf16>
    %cst = arith.constant dense<0.000000e+00> : vector<128x32xf32>
    %5 = tpu.matmul %3, %4, %cst {dimension_numbers = #tpu.dot_dimension_numbers<[1], [0], [0], [1], [0, 0, 1, 1], [], []>} : vector<128x8xbf16>, vector<8x32xbf16>, vector<128x32xf32> -> vector<128x32xf32>
    %6 = arith.truncf %5 : vector<128x32xf32> to vector<128x32xbf16>
    %cst_7 = arith.constant dense<0.000000e+00> : vector<128x32xf32>
    %7 = tpu.matmul %1, %6, %cst_7 {dimension_numbers = #tpu.dot_dimension_numbers<[1], [0], [0], [1], [0, 0, 1, 1], [], []>} : vector<128x128xbf16>, vector<128x32xbf16>, vector<128x32xf32> -> vector<128x32xf32>
    %c0_8 = arith.constant 0 : index
    %c0_9 = arith.constant 0 : index
    %8 = vector.load %arg4[%c0_8, %c0_9] : memref<1x32xf32, #tpu.memory_space<vmem>>, vector<1x32xf32>
    %9 = vector.broadcast %8 : vector<1x32xf32> to vector<128x32xf32>
    %10 = arith.addf %7, %9 : vector<128x32xf32>
    %cst_10 = arith.constant 0.000000e+00 : f32
    %11 = vector.broadcast %cst_10 : f32 to vector<128x32xf32>
    %12 = arith.maximumf %10, %11 : vector<128x32xf32>
    %13 = arith.truncf %12 : vector<128x32xf32> to vector<128x32xbf16>
    %c0_11 = arith.constant 0 : index
    %c0_12 = arith.constant 0 : index
    %14 = vector.load %arg5[%c0_11, %c0_12] : memref<32x16xbf16, #tpu.memory_space<vmem>>, vector<32x16xbf16>
    %cst_13 = arith.constant dense<0.000000e+00> : vector<128x16xf32>
    %15 = tpu.matmul %13, %14, %cst_13 {dimension_numbers = #tpu.dot_dimension_numbers<[1], [0], [0], [1], [0, 0, 1, 1], [], []>} : vector<128x32xbf16>, vector<32x16xbf16>, vector<128x16xf32> -> vector<128x16xf32>
    %16 = arith.truncf %15 : vector<128x16xf32> to vector<128x16xbf16>
    %cst_14 = arith.constant dense<0.000000e+00> : vector<128x16xf32>
    %17 = tpu.matmul %1, %16, %cst_14 {dimension_numbers = #tpu.dot_dimension_numbers<[1], [0], [0], [1], [0, 0, 1, 1], [], []>} : vector<128x128xbf16>, vector<128x16xbf16>, vector<128x16xf32> -> vector<128x16xf32>
    %c0_15 = arith.constant 0 : index
    %c0_16 = arith.constant 0 : index
    %18 = vector.load %arg6[%c0_15, %c0_16] : memref<1x16xf32, #tpu.memory_space<vmem>>, vector<1x16xf32>
    %19 = vector.broadcast %18 : vector<1x16xf32> to vector<128x16xf32>
    %20 = arith.addf %17, %19 : vector<128x16xf32>
    %cst_17 = arith.constant 0.000000e+00 : f32
    %21 = vector.broadcast %cst_17 : f32 to vector<128x16xf32>
    %22 = arith.maximumf %20, %21 : vector<128x16xf32>
    %c0_18 = arith.constant 0 : index
    %c0_19 = arith.constant 0 : index
    %c0_20 = arith.constant 0 : index
    %23 = vector.load %arg8[%c0_18, %c0_19, %c0_20] : memref<1x128x16xf32, #tpu.memory_space<vmem>>, vector<1x128x16xf32>
    %24 = vector.shape_cast %23 : vector<1x128x16xf32> to vector<128x16xf32>
    %25 = vector.shape_cast %22 : vector<128x16xf32> to vector<1x128x16xf32>
    tpu.vector_store %arg8[%c0_18, %c0_19, %c0_20], %25 {strides = array<i32>} : memref<1x128x16xf32, #tpu.memory_space<vmem>>, vector<1x128x16xf32>,
    %26 = arith.truncf %22 : vector<128x16xf32> to vector<128x16xbf16>
    %cst_21 = arith.constant 1.000000e+00 : bf16
    %27 = vector.broadcast %cst_21 : bf16 to vector<1x16xbf16>
    %cst_22 = arith.constant dense<0.000000e+00> : vector<1x128xf32>
    %28 = tpu.matmul %27, %26, %cst_22 {dimension_numbers = #tpu.dot_dimension_numbers<[1], [1], [0], [0], [0, 0, 1, 0], [], []>} : vector<1x16xbf16>, vector<128x16xbf16>, vector<1x128xf32> -> vector<1x128xf32>
    %c0_23 = arith.constant 0 : index
    %c0_24 = arith.constant 0 : index
    %c0_25 = arith.constant 0 : index
    %29 = vector.load %arg7[%c0_23, %c0_24, %c0_25] : memref<1x1x128xf32, #tpu.memory_space<vmem>>, vector<1x1x128xf32>
    %30 = vector.shape_cast %29 : vector<1x1x128xf32> to vector<1x128xf32>
    %31 = vector.shape_cast %28 : vector<1x128xf32> to vector<1x1x128xf32>
    tpu.vector_store %arg7[%c0_23, %c0_24, %c0_25], %31 {strides = array<i32>} : memref<1x1x128xf32, #tpu.memory_space<vmem>>, vector<1x1x128xf32>,
    return
  }
  func.func @transform_0(%arg0: i32) -> (i32, i32, i32) {
    %c0_i32 = arith.constant 0 : i32
    %c0_i32_0 = arith.constant 0 : i32
    %c0_i32_1 = arith.constant 0 : i32
    return %arg0, %c0_i32, %c0_i32_0 : i32, i32, i32
  }
  func.func @transform_1(%arg0: i32) -> (i32, i32, i32) {
    %c0_i32 = arith.constant 0 : i32
    %c0_i32_0 = arith.constant 0 : i32
    %c0_i32_1 = arith.constant 0 : i32
    return %arg0, %c0_i32, %c0_i32_0 : i32, i32, i32
  }
  func.func @transform_2(%arg0: i32) -> (i32, i32) {
    %c0_i32 = arith.constant 0 : i32
    %c0_i32_0 = arith.constant 0 : i32
    %c0_i32_1 = arith.constant 0 : i32
    return %c0_i32, %c0_i32_0 : i32, i32
  }
  func.func @transform_3(%arg0: i32) -> (i32, i32) {
    %c0_i32 = arith.constant 0 : i32
    %c0_i32_0 = arith.constant 0 : i32
    %c0_i32_1 = arith.constant 0 : i32
    return %c0_i32, %c0_i32_0 : i32, i32
  }
  func.func @transform_4(%arg0: i32) -> (i32, i32) {
    %c0_i32 = arith.constant 0 : i32
    %c0_i32_0 = arith.constant 0 : i32
    %c0_i32_1 = arith.constant 0 : i32
    return %c0_i32, %c0_i32_0 : i32, i32
  }
  func.func @transform_5(%arg0: i32) -> (i32, i32) {
    %c0_i32 = arith.constant 0 : i32
    %c0_i32_0 = arith.constant 0 : i32
    %c0_i32_1 = arith.constant 0 : i32
    return %c0_i32, %c0_i32_0 : i32, i32
  }
  func.func @transform_6(%arg0: i32) -> (i32, i32, i32) {
    %c0_i32 = arith.constant 0 : i32
    %c0_i32_0 = arith.constant 0 : i32
    %c0_i32_1 = arith.constant 0 : i32
    return %arg0, %c0_i32, %c0_i32_0 : i32, i32, i32
  }
  func.func @transform_7(%arg0: i32) -> (i32, i32, i32) {
    %c0_i32 = arith.constant 0 : i32
    %c0_i32_0 = arith.constant 0 : i32
    %c0_i32_1 = arith.constant 0 : i32
    return %arg0, %c0_i32, %c0_i32_0 : i32, i32, i32
  }
}

</mosaic_0001>

<llo_original>
// kernel: tpu_custom_call.1
$region0: #{tpu_custom_call.1}
  #allocation0 [shape = 'u32[]', space=smem, size = 0x4, offset = 0x4, fixed_abs, tag = 'smem constant byte address 0x4 - core index']
  #allocation1 [shape = 'u32[144,128]{1,0:T(1,128)}', space=vmem, size = 0x12000, scoped, tag = 'internal scratch']
  %s0 = inlined_call_operand.vmem [shape: bf16[2,128,128], index: 0, kind: input, shape index: {}]
  %s1 = inlined_call_operand.vmem [shape: bf16[2,128,8], index: 1, kind: input, shape index: {}]
  %s2 = inlined_call_operand.vmem [shape: bf16[8,32], index: 2, kind: input, shape index: {}]
  %s3 = inlined_call_operand.vmem [shape: f32[1,32], index: 3, kind: input, shape index: {}]
  %s4 = inlined_call_operand.vmem [shape: bf16[32,16], index: 4, kind: input, shape index: {}]
  %s5 = inlined_call_operand.vmem [shape: f32[1,16], index: 5, kind: input, shape index: {}]
  %s6 = inlined_call_operand.hbm [shape: f32[2,1,128], index: 6, kind: output, shape index: {0}]
  %s7 = inlined_call_operand.vmem [shape: f32[2,128,16], index: 7, kind: output, shape index: {1}]
  %8 = xla_tuple %s6, %s7
  %s9 = sld [smem:[#allocation0]]
  $region65: #{tpu_custom_call.1} parent=0
    _
  %s11 = ssub.s32 1, %s9
  %s12 = scalar_select 0, %s11, %s9
  $region1: #{tpu_custom_call.1} parent=0
    #allocation2 [shape = 'u8[1024]{0}', space=vmem, size = 0x400, scoped, tag = 'output window, operand 0']
    #allocation3 [shape = 's32[2]{0}', space=sflag, size = 0x8, scoped, tag = 'scoped memory for tpu_custom_call.1']
    %13 = vsyncpa [#allocation3], 0
    %s14 = scalar_lea.sflag [#allocation3], 1
    %15 = vsyncpa %s14, 0
    loop: start=0, step=1, limit=4
    $region2: #{tpu_custom_call.1} parent=1 // loop_pre_header
      _
    $region3: #{tpu_custom_call.1} parent=1 // loop_header
      %s17 = sphi 0, %s21
      %p18 = scmp.ge.s32.totalorder %s17, 4
      %s27 = sphi 0, %s29
      %s30 = sphi 0, %s27
      %s31 = sphi 0, %s30
      %s47 = sphi 0, %s31
      %s53 = sphi 0, %s55
      %s56 = sphi 0, %s53
      %s57 = sphi 0, %s56
      %s73 = sphi 0, %s57
      %s77 = sphi 0, %s77
      %s79 = sphi 0, %s77
      %s80 = sphi 0, %s79
      %s94 = sphi 0, %s80
      %s98 = sphi 0, %s98
      %s100 = sphi 0, %s98
      %s101 = sphi 0, %s100
      %s115 = sphi 0, %s101
      %s119 = sphi 0, %s119
      %s121 = sphi 0, %s119
      %s122 = sphi 0, %s121
      %s136 = sphi 0, %s122
      %s140 = sphi 0, %s140
      %s142 = sphi 0, %s140
      %s143 = sphi 0, %s142
      %s157 = sphi 0, %s143
      %s163 = sphi 0, %s165
      %s166 = sphi 0, %s163
      %s167 = sphi 0, %s166
      %s183 = sphi 0, %s167
      %s189 = sphi 0, %s191
      %s192 = sphi 0, %s189
      %s193 = sphi 0, %s192
      %s209 = sphi 0, %s193
    $region4: #{tpu_custom_call.1} parent=1 // loop_header_branch
      %20 = sbr.rel (%p18) target = $region8
    $region5: #{tpu_custom_call.1} parent=1 // loop_body
      %s22 = ssub.s32 %s17, 1
      %s23 = ssub.s32 %s17, 2
      %s24 = sadd.s32 %s17, 1
      %s25 = ssub.s32 %s17, %s24
      %p26 = scmp.eq.s32.totalorder %s25, 0
      %s28 = sadd.s32 %s27, 1
      %s29 = scalar_select %p26, %s27, %s28
      %p32 = pneg %p26
      %p33 = scmp.eq.s32.totalorder %s17, 1
      %p34 = por %p32, %p33
      %p35 = scmp.ne.s32.totalorder %s27, %s30
      %p36 = scmp.eq.s32.totalorder %s17, 0
      %p37 = por %p35, %p36
      %p38 = scmp.ne.s32.totalorder %s27, %s30
      %p39 = scmp.eq.s32.totalorder %s22, 1
      %p40 = por %p38, %p39
      %p41 = scmp.ne.s32.totalorder %s30, %s31
      %p42 = scmp.eq.s32.totalorder %s22, 0
      %p43 = por %p41, %p42
      %p44 = scmp.ne.s32.totalorder %s30, %s31
      %p45 = scmp.eq.s32.totalorder %s23, 1
      %p46 = por %p44, %p45
      %p48 = scmp.ne.s32.totalorder %s31, %s47
      %p49 = scmp.eq.s32.totalorder %s23, 0
      %p50 = por %p48, %p49
      %s51 = ssub.s32 %s17, %s24
      %p52 = scmp.eq.s32.totalorder %s51, 0
      %s54 = sadd.s32 %s53, 1
      %s55 = scalar_select %p52, %s53, %s54
      %p58 = pneg %p52
      %p59 = scmp.eq.s32.totalorder %s17, 1
      %p60 = por %p58, %p59
      %p61 = scmp.ne.s32.totalorder %s53, %s56
      %p62 = scmp.eq.s32.totalorder %s17, 0
      %p63 = por %p61, %p62
      %p64 = scmp.ne.s32.totalorder %s53, %s56
      %p65 = scmp.eq.s32.totalorder %s22, 1
      %p66 = por %p64, %p65
      %p67 = scmp.ne.s32.totalorder %s56, %s57
      %p68 = scmp.eq.s32.totalorder %s22, 0
      %p69 = por %p67, %p68
      %p70 = scmp.ne.s32.totalorder %s56, %s57
      %p71 = scmp.eq.s32.totalorder %s23, 1
      %p72 = por %p70, %p71
      %p74 = scmp.ne.s32.totalorder %s57, %s73
      %p75 = scmp.eq.s32.totalorder %s23, 0
      %p76 = por %p74, %p75
      %s78 = sadd.s32 %s77, 1
      %p81 = scmp.eq.s32.totalorder %s17, 1
      %p82 = scmp.ne.s32.totalorder %s77, %s79
      %p83 = scmp.eq.s32.totalorder %s17, 0
      %p84 = por %p82, %p83
      %p85 = scmp.ne.s32.totalorder %s77, %s79
      %p86 = scmp.eq.s32.totalorder %s22, 1
      %p87 = por %p85, %p86
      %p88 = scmp.ne.s32.totalorder %s79, %s80
      %p89 = scmp.eq.s32.totalorder %s22, 0
      %p90 = por %p88, %p89
      %p91 = scmp.ne.s32.totalorder %s79, %s80
      %p92 = scmp.eq.s32.totalorder %s23, 1
      %p93 = por %p91, %p92
      %p95 = scmp.ne.s32.totalorder %s80, %s94
      %p96 = scmp.eq.s32.totalorder %s23, 0
      %p97 = por %p95, %p96
      %s99 = sadd.s32 %s98, 1
      %p102 = scmp.eq.s32.totalorder %s17, 1
      %p103 = scmp.ne.s32.totalorder %s98, %s100
      %p104 = scmp.eq.s32.totalorder %s17, 0
      %p105 = por %p103, %p104
      %p106 = scmp.ne.s32.totalorder %s98, %s100
      %p107 = scmp.eq.s32.totalorder %s22, 1
      %p108 = por %p106, %p107
      %p109 = scmp.ne.s32.totalorder %s100, %s101
      %p110 = scmp.eq.s32.totalorder %s22, 0
      %p111 = por %p109, %p110
      %p112 = scmp.ne.s32.totalorder %s100, %s101
      %p113 = scmp.eq.s32.totalorder %s23, 1
      %p114 = por %p112, %p113
      %p116 = scmp.ne.s32.totalorder %s101, %s115
      %p117 = scmp.eq.s32.totalorder %s23, 0
      %p118 = por %p116, %p117
      %s120 = sadd.s32 %s119, 1
      %p123 = scmp.eq.s32.totalorder %s17, 1
      %p124 = scmp.ne.s32.totalorder %s119, %s121
      %p125 = scmp.eq.s32.totalorder %s17, 0
      %p126 = por %p124, %p125
      %p127 = scmp.ne.s32.totalorder %s119, %s121
      %p128 = scmp.eq.s32.totalorder %s22, 1
      %p129 = por %p127, %p128
      %p130 = scmp.ne.s32.totalorder %s121, %s122
      %p131 = scmp.eq.s32.totalorder %s22, 0
      %p132 = por %p130, %p131
      %p133 = scmp.ne.s32.totalorder %s121, %s122
      %p134 = scmp.eq.s32.totalorder %s23, 1
      %p135 = por %p133, %p134
      %p137 = scmp.ne.s32.totalorder %s122, %s136
      %p138 = scmp.eq.s32.totalorder %s23, 0
      %p139 = por %p137, %p138
      %s141 = sadd.s32 %s140, 1
      %p144 = scmp.eq.s32.totalorder %s17, 1
      %p145 = scmp.ne.s32.totalorder %s140, %s142
      %p146 = scmp.eq.s32.totalorder %s17, 0
      %p147 = por %p145, %p146
      %p148 = scmp.ne.s32.totalorder %s140, %s142
      %p149 = scmp.eq.s32.totalorder %s22, 1
      %p150 = por %p148, %p149
      %p151 = scmp.ne.s32.totalorder %s142, %s143
      %p152 = scmp.eq.s32.totalorder %s22, 0
      %p153 = por %p151, %p152
      %p154 = scmp.ne.s32.totalorder %s142, %s143
      %p155 = scmp.eq.s32.totalorder %s23, 1
      %p156 = por %p154, %p155
      %p158 = scmp.ne.s32.totalorder %s143, %s157
      %p159 = scmp.eq.s32.totalorder %s23, 0
      %p160 = por %p158, %p159
      %s161 = ssub.s32 %s17, %s24
      %p162 = scmp.eq.s32.totalorder %s161, 0
      %s164 = sadd.s32 %s163, 1
      %s165 = scalar_select %p162, %s163, %s164
      %p168 = pneg %p162
      %p169 = scmp.eq.s32.totalorder %s17, 1
      %p170 = por %p168, %p169
      %p171 = scmp.ne.s32.totalorder %s163, %s166
      %p172 = scmp.eq.s32.totalorder %s17, 0
      %p173 = por %p171, %p172
      %p174 = scmp.ne.s32.totalorder %s163, %s166
      %p175 = scmp.eq.s32.totalorder %s22, 1
      %p176 = por %p174, %p175
      %p177 = scmp.ne.s32.totalorder %s166, %s167
      %p178 = scmp.eq.s32.totalorder %s22, 0
      %p179 = por %p177, %p178
      %p180 = scmp.ne.s32.totalorder %s166, %s167
      %p181 = scmp.eq.s32.totalorder %s23, 1
      %p182 = por %p180, %p181
      %p184 = scmp.ne.s32.totalorder %s167, %s183
      %p185 = scmp.eq.s32.totalorder %s23, 0
      %p186 = por %p184, %p185
      %s187 = ssub.s32 %s17, %s24
      %p188 = scmp.eq.s32.totalorder %s187, 0
      %s190 = sadd.s32 %s189, 1
      %s191 = scalar_select %p188, %s189, %s190
      %p194 = pneg %p188
      %p195 = scmp.eq.s32.totalorder %s17, 1
      %p196 = por %p194, %p195
      %p197 = scmp.ne.s32.totalorder %s189, %s192
      %p198 = scmp.eq.s32.totalorder %s17, 0
      %p199 = por %p197, %p198
      %p200 = scmp.ne.s32.totalorder %s189, %s192
      %p201 = scmp.eq.s32.totalorder %s22, 1
      %p202 = por %p200, %p201
      %p203 = scmp.ne.s32.totalorder %s192, %s193
      %p204 = scmp.eq.s32.totalorder %s22, 0
      %p205 = por %p203, %p204
      %p206 = scmp.ne.s32.totalorder %s192, %s193
      %p207 = scmp.eq.s32.totalorder %s23, 1
      %p208 = por %p206, %p207
      %p210 = scmp.ne.s32.totalorder %s193, %s209
      %p211 = scmp.eq.s32.totalorder %s23, 0
      %p212 = por %p210, %p211
      %p213 = scmp.le.s32.totalorder 1, %s17
      %p214 = scmp.lt.s32.totalorder %s17, 3
      %p215 = pnand %p213, %p214
      %p216 = pneg %p215
      // Predicated region
      $region9: #{tpu_custom_call.1} parent=5 // pred_check
        _
      $region10: #{tpu_custom_call.1} parent=5 // pred_check_branch
        %218 = sbr.rel (%p215) target = $region12
      $region11: #{tpu_custom_call.1} parent=5 // pred_region
        %s219 = ssub.s32 %s17, 1
        // Predicated region
        $region13: #{tpu_custom_call.1} parent=11 // pred_check
          %p220 = pneg %p90
        $region14: #{tpu_custom_call.1} parent=11 // pred_check_branch
          %222 = sbr.rel (%p220) target = $region16
        $region15: #{tpu_custom_call.1} parent=11 // pred_region
          _
        $region16: #{tpu_custom_call.1} parent=11 // pred_fallthru
          _
        // Predicated region
        $region17: #{tpu_custom_call.1} parent=11 // pred_check
          %p223 = pneg %p111
        $region18: #{tpu_custom_call.1} parent=11 // pred_check_branch
          %225 = sbr.rel (%p223) target = $region20
        $region19: #{tpu_custom_call.1} parent=11 // pred_region
          _
        $region20: #{tpu_custom_call.1} parent=11 // pred_fallthru
          _
        // Predicated region
        $region21: #{tpu_custom_call.1} parent=11 // pred_check
          %p226 = pneg %p132
        $region22: #{tpu_custom_call.1} parent=11 // pred_check_branch
          %228 = sbr.rel (%p226) target = $region24
        $region23: #{tpu_custom_call.1} parent=11 // pred_region
          _
        $region24: #{tpu_custom_call.1} parent=11 // pred_fallthru
          _
        // Predicated region
        $region25: #{tpu_custom_call.1} parent=11 // pred_check
          %p229 = pneg %p153
        $region26: #{tpu_custom_call.1} parent=11 // pred_check_branch
          %231 = sbr.rel (%p229) target = $region28
        $region27: #{tpu_custom_call.1} parent=11 // pred_region
          _
        $region28: #{tpu_custom_call.1} parent=11 // pred_fallthru
          _
      $region12: #{tpu_custom_call.1} parent=5 // pred_fallthru
        _
      %p232 = scmp.lt.s32.totalorder %s17, 2
      // Predicated region
      $region29: #{tpu_custom_call.1} parent=5 // pred_check
        %p233 = pneg %p232
      $region30: #{tpu_custom_call.1} parent=5 // pred_check_branch
        %235 = sbr.rel (%p233) target = $region32
      $region31: #{tpu_custom_call.1} parent=5 // pred_region
        // Predicated region
        $region33: #{tpu_custom_call.1} parent=31 // pred_check
          %p236 = pneg %p37
        $region34: #{tpu_custom_call.1} parent=31 // pred_check_branch
          %238 = sbr.rel (%p236) target = $region36
        $region35: #{tpu_custom_call.1} parent=31 // pred_region
          %p239 = scmp.lt.s32.totalorder %s17, 1
          %s240 = scalar_select %p239, %s17, 1
          %s241 = smul.addr %s240, 16
          %s242 = smul.addr %s241, 4
          %s243 = scalar_lea.vmem %s0, %s242
        $region36: #{tpu_custom_call.1} parent=31 // pred_fallthru
          _
        // Predicated region
        $region37: #{tpu_custom_call.1} parent=31 // pred_check
          %p244 = pneg %p63
        $region38: #{tpu_custom_call.1} parent=31 // pred_check_branch
          %246 = sbr.rel (%p244) target = $region40
        $region39: #{tpu_custom_call.1} parent=31 // pred_region
          %p247 = scmp.lt.s32.totalorder %s17, 1
          %s248 = scalar_select %p247, %s17, 1
          %s249 = smul.addr %s248, 16
          %s250 = smul.addr %s249, 4
          %s251 = scalar_lea.vmem %s1, %s250
        $region40: #{tpu_custom_call.1} parent=31 // pred_fallthru
          _
      $region32: #{tpu_custom_call.1} parent=5 // pred_fallthru
        _
      %p252 = scmp.le.s32.totalorder 1, %s17
      %p253 = scmp.lt.s32.totalorder %s17, 3
      %p254 = pnand %p252, %p253
      %p255 = pneg %p254
      // Predicated region
      $region41: #{tpu_custom_call.1} parent=5 // pred_check
        _
      $region42: #{tpu_custom_call.1} parent=5 // pred_check_branch
        %257 = sbr.rel (%p254) target = $region44
      $region43: #{tpu_custom_call.1} parent=5 // pred_region
        %s258 = ssub.s32 %s17, 1
        %p259 = scmp.lt.s32.totalorder %s22, 1
        %s260 = scalar_select %p259, %s22, 1
        %s261 = smul.addr %s260, 16
        %s262 = smul.addr %s261, 4
        %s263 = scalar_lea.vmem %s0, %s262
        %p264 = pneg %p43
        %p265 = pneg %p40
        %p266 = scmp.lt.s32.totalorder %s22, 1
        %s267 = scalar_select %p266, %s22, 1
        %s268 = smul.addr %s267, 16
        %s269 = smul.addr %s268, 4
        %s270 = scalar_lea.vmem %s1, %s269
        %p271 = pneg %p69
        %p272 = pneg %p66
        %p273 = pneg %p90
        %p274 = pneg %p87
        %p275 = pneg %p111
        %p276 = pneg %p108
        %p277 = pneg %p132
        %p278 = pneg %p129
        %p279 = pneg %p153
        %p280 = pneg %p150
        %p281 = pneg %p179
        %p282 = pneg %p176
        %s283 = sand.u32 %s166, 1
        %s284 = scalar_lea.sflag [#allocation3], %s283
        %s285 = sand.u32 %s166, 1
        %s286 = scalar_lea.vmem [#allocation2], %s285
        %p287 = pneg %p205
        %p288 = pneg %p202
        %p289 = scmp.lt.s32.totalorder %s22, 1
        %s290 = scalar_select %p289, %s22, 1
        %s291 = smul.addr %s290, 16
        %s292 = smul.addr %s291, 8
        %s293 = scalar_lea.vmem %s7, %s292
        %p294 = scmp.lt.s32.totalorder %s22, 1
        %s295 = scalar_select %p294, %s22, 1
        %s296 = smul.addr %s295, 16
        %s297 = smul.addr %s296, 4
        %s298 = scalar_lea.vmem %s0, %s297
        %p299 = scmp.lt.s32.totalorder %s22, 1
        %s300 = scalar_select %p299, %s22, 1
        %s301 = smul.addr %s300, 16
        %s302 = smul.addr %s301, 4
        %s303 = scalar_lea.vmem %s1, %s302
        %p304 = scmp.lt.s32.totalorder %s22, 1
        %s305 = scalar_select %p304, %s22, 1
        %s306 = smul.addr %s305, 16
        %s307 = smul.addr %s306, 8
        %s308 = scalar_lea.vmem %s7, %s307
        %v311 = vld [vmem:[%s298] sm:$0xf]
        %v312 = vld [vmem:[%s298 + $0x4] sm:$0xf]
        %v313 = vld [vmem:[%s298 + $0x8] sm:$0xf]
        %v314 = vld [vmem:[%s298 + $0xc] sm:$0xf]
        %v315 = vld [vmem:[%s298 + $0x10] sm:$0xf]
        %v316 = vld [vmem:[%s298 + $0x14] sm:$0xf]
        %v317 = vld [vmem:[%s298 + $0x18] sm:$0xf]
        %v318 = vld [vmem:[%s298 + $0x1c] sm:$0xf]
        %v319 = vld [vmem:[%s298 + $0x20] sm:$0xf]
        %v320 = vld [vmem:[%s298 + $0x24] sm:$0xf]
        %v321 = vld [vmem:[%s298 + $0x28] sm:$0xf]
        %v322 = vld [vmem:[%s298 + $0x2c] sm:$0xf]
        %v323 = vld [vmem:[%s298 + $0x30] sm:$0xf]
        %v324 = vld [vmem:[%s298 + $0x34] sm:$0xf]
        %v325 = vld [vmem:[%s298 + $0x38] sm:$0xf]
        %v326 = vld [vmem:[%s298 + $0x3c] sm:$0xf]
        %v327 = vld [vmem:[%s303] sm:$0xf]
        %v328 = vld [vmem:[%s303 + $0x4] sm:$0xf]
        %v329 = vld [vmem:[%s303 + $0x8] sm:$0xf]
        %v330 = vld [vmem:[%s303 + $0xc] sm:$0xf]
        %v331 = vld [vmem:[%s303 + $0x10] sm:$0xf]
        %v332 = vld [vmem:[%s303 + $0x14] sm:$0xf]
        %v333 = vld [vmem:[%s303 + $0x18] sm:$0xf]
        %v334 = vld [vmem:[%s303 + $0x1c] sm:$0xf]
        %v335 = vld [vmem:[%s303 + $0x20] sm:$0xf]
        %v336 = vld [vmem:[%s303 + $0x24] sm:$0xf]
        %v337 = vld [vmem:[%s303 + $0x28] sm:$0xf]
        %v338 = vld [vmem:[%s303 + $0x2c] sm:$0xf]
        %v339 = vld [vmem:[%s303 + $0x30] sm:$0xf]
        %v340 = vld [vmem:[%s303 + $0x34] sm:$0xf]
        %v341 = vld [vmem:[%s303 + $0x38] sm:$0xf]
        %v342 = vld [vmem:[%s303 + $0x3c] sm:$0xf]
        %v343 = vld [vmem:[%s2] sm:$0xf]
        %v360 = vunpack.c.l.b16 %v327
        %v361 = vunpack.c.l.b16 %v328
        %v362 = vunpack.c.l.b16 %v329
        %v363 = vunpack.c.l.b16 %v330
        %v364 = vunpack.c.l.b16 %v331
        %v365 = vunpack.c.l.b16 %v332
        %v366 = vunpack.c.l.b16 %v333
        %v367 = vunpack.c.l.b16 %v334
        %v368 = vunpack.c.l.b16 %v335
        %v369 = vunpack.c.l.b16 %v336
        %v370 = vunpack.c.l.b16 %v337
        %v371 = vunpack.c.l.b16 %v338
        %v372 = vunpack.c.l.b16 %v339
        %v373 = vunpack.c.l.b16 %v340
        %v374 = vunpack.c.l.b16 %v341
        %v375 = vunpack.c.l.b16 %v342
        %v376 = vpack.c.b16 %v361, %v360
        %v377 = vpack.c.b16 %v363, %v362
        %v378 = vpack.c.b16 %v365, %v364
        %v379 = vpack.c.b16 %v367, %v366
        %v380 = vpack.c.b16 %v369, %v368
        %v381 = vpack.c.b16 %v371, %v370
        %v382 = vpack.c.b16 %v373, %v372
        %v383 = vpack.c.b16 %v375, %v374
        %vm384 = vcmask 64512
        %v386 = vsel %vm384, %v376, 0
        %v389 = vsel %vm384, %v377, 0
        %v392 = vsel %vm384, %v378, 0
        %v395 = vsel %vm384, %v379, 0
        %v398 = vsel %vm384, %v380, 0
        %v401 = vsel %vm384, %v381, 0
        %v404 = vsel %vm384, %v382, 0
        %v407 = vsel %vm384, %v383, 0
        %vm409 = vcmask 1043456
        %v411 = vsel %vm409, %v343, 0
        %413 = vmatprep.subr.bf16.mxu0 0
        %414 = vmatpush1.bf16.msra.mxu0 0
        %415 = vmatprep.subr.bf16.mxu0 0
        %416 = vmatpush1.bf16.msra.mxu0 0
        %417 = vmatprep.subr.bf16.mxu0 0
        %418 = vmatpush1.bf16.msra.mxu0 0
        %419 = vmatprep.subr.bf16.mxu0 0
        %420 = vmatpush1.bf16.msra.mxu0 0
        %421 = vmatprep.subr.bf16.mxu0 0
        %422 = vmatpush1.bf16.msra.mxu0 0
        %423 = vmatprep.subr.bf16.mxu0 0
        %424 = vmatpush1.bf16.msra.mxu0 0
        %425 = vmatprep.subr.bf16.mxu0 0
        %426 = vmatpush1.bf16.msra.mxu0 0
        %427 = vmatprep.subr.bf16.mxu0 0
        %428 = vmatpush1.bf16.msra.mxu0 %v411
        %429 = vmatprep.subr.bf16.mxu0 0
        %430 = vmatpush2.bf16.msra.mxu0 0
        %431 = vmatprep.subr.bf16.mxu0 0
        %432 = vmatpush2.bf16.msra.mxu0 0
        %433 = vmatprep.subr.bf16.mxu0 0
        %434 = vmatpush2.bf16.msra.mxu0 0
        %435 = vmatprep.subr.bf16.mxu0 0
        %436 = vmatpush2.bf16.msra.mxu0 0
        %437 = vmatprep.subr.bf16.mxu0 0
        %438 = vmatpush2.bf16.msra.mxu0 0
        %439 = vmatprep.subr.bf16.mxu0 0
        %440 = vmatpush2.bf16.msra.mxu0 0
        %441 = vmatprep.subr.bf16.mxu0 0
        %442 = vmatpush2.bf16.msra.mxu0 0
        %443 = vmatprep.subr.bf16.mxu0 0
        %444 = vmatpush2.bf16.msra.mxu0 0
        %445 = vmatprep.mubr.bf16.mxu0 0
        %446 = vmatmul.mubr.bf16.gmra.mxu0 %v386
        %v447 = vpop.f32.mrf.mxu0
        %v448 = vadd.f32 0.0, %v447
        %v449 = vpop.f32.mrf.mxu0
        %v450 = vpop.f32.mrf.mxu0
        %v451 = vadd.f32 0.0, %v450
        %v452 = vpop.f32.mrf.mxu0
        %453 = vmatprep.mubr.bf16.mxu0 0
        %454 = vmatmul.mubr.bf16.gmra.mxu0 %v389
        %v455 = vpop.f32.mrf.mxu0
        %v456 = vadd.f32 0.0, %v455
        %v457 = vpop.f32.mrf.mxu0
        %v458 = vpop.f32.mrf.mxu0
        %v459 = vadd.f32 0.0, %v458
        %v460 = vpop.f32.mrf.mxu0
        %461 = vmatprep.mubr.bf16.mxu0 0
        %462 = vmatmul.mubr.bf16.gmra.mxu0 %v392
        %v463 = vpop.f32.mrf.mxu0
        %v464 = vadd.f32 0.0, %v463
        %v465 = vpop.f32.mrf.mxu0
        %v466 = vpop.f32.mrf.mxu0
        %v467 = vadd.f32 0.0, %v466
        %v468 = vpop.f32.mrf.mxu0
        %469 = vmatprep.mubr.bf16.mxu0 0
        %470 = vmatmul.mubr.bf16.gmra.mxu0 %v395
        %v471 = vpop.f32.mrf.mxu0
        %v472 = vadd.f32 0.0, %v471
        %v473 = vpop.f32.mrf.mxu0
        %v474 = vpop.f32.mrf.mxu0
        %v475 = vadd.f32 0.0, %v474
        %v476 = vpop.f32.mrf.mxu0
        %477 = vmatprep.mubr.bf16.mxu0 0
        %478 = vmatmul.mubr.bf16.gmra.mxu0 %v398
        %v479 = vpop.f32.mrf.mxu0
        %v480 = vadd.f32 0.0, %v479
        %v481 = vpop.f32.mrf.mxu0
        %v482 = vpop.f32.mrf.mxu0
        %v483 = vadd.f32 0.0, %v482
        %v484 = vpop.f32.mrf.mxu0
        %485 = vmatprep.mubr.bf16.mxu0 0
        %486 = vmatmul.mubr.bf16.gmra.mxu0 %v401
        %v487 = vpop.f32.mrf.mxu0
        %v488 = vadd.f32 0.0, %v487
        %v489 = vpop.f32.mrf.mxu0
        %v490 = vpop.f32.mrf.mxu0
        %v491 = vadd.f32 0.0, %v490
        %v492 = vpop.f32.mrf.mxu0
        %493 = vmatprep.mubr.bf16.mxu0 0
        %494 = vmatmul.mubr.bf16.gmra.mxu0 %v404
        %v495 = vpop.f32.mrf.mxu0
        %v496 = vadd.f32 0.0, %v495
        %v497 = vpop.f32.mrf.mxu0
        %v498 = vpop.f32.mrf.mxu0
        %v499 = vadd.f32 0.0, %v498
        %v500 = vpop.f32.mrf.mxu0
        %501 = vmatprep.mubr.bf16.mxu0 0
        %502 = vmatmul.mubr.bf16.gmra.mxu0 %v407
        %v503 = vpop.f32.mrf.mxu0
        %v504 = vadd.f32 0.0, %v503
        %v505 = vpop.f32.mrf.mxu0
        %v506 = vpop.f32.mrf.mxu0
        %v507 = vadd.f32 0.0, %v506
        %v508 = vpop.f32.mrf.mxu0
        %509 = vdwg.mxu0
        %v510 = vpack.c.bf16 %v451, %v448
        %v511 = vpack.c.bf16 %v459, %v456
        %v512 = vpack.c.bf16 %v467, %v464
        %v513 = vpack.c.bf16 %v475, %v472
        %v514 = vpack.c.bf16 %v483, %v480
        %v515 = vpack.c.bf16 %v491, %v488
        %v516 = vpack.c.bf16 %v499, %v496
        %v517 = vpack.c.bf16 %v507, %v504
        %v518 = vld [vmem:[%s3] sm:$0x1]
        %v520 = vlaneseq
        %v521 = vshrl.u32 %v520, 7
        %v522 = vsub.s32 0, %v521
        %v523 = vrot.slane %v518, %v522
        %v541 = vunpack.c.l.b16 %v311
        %v542 = vunpack.c.l.b16 %v312
        %v543 = vunpack.c.l.b16 %v313
        %v544 = vunpack.c.l.b16 %v314
        %v545 = vunpack.c.l.b16 %v315
        %v546 = vunpack.c.l.b16 %v316
        %v547 = vunpack.c.l.b16 %v317
        %v548 = vunpack.c.l.b16 %v318
        %v549 = vunpack.c.l.b16 %v319
        %v550 = vunpack.c.l.b16 %v320
        %v551 = vunpack.c.l.b16 %v321
        %v552 = vunpack.c.l.b16 %v322
        %v553 = vunpack.c.l.b16 %v323
        %v554 = vunpack.c.l.b16 %v324
        %v555 = vunpack.c.l.b16 %v325
        %v556 = vunpack.c.l.b16 %v326
        %v557 = vpack.c.b16 %v542, %v541
        %v558 = vpack.c.b16 %v544, %v543
        %v559 = vpack.c.b16 %v546, %v545
        %v560 = vpack.c.b16 %v548, %v547
        %v561 = vpack.c.b16 %v550, %v549
        %v562 = vpack.c.b16 %v552, %v551
        %v563 = vpack.c.b16 %v554, %v553
        %v564 = vpack.c.b16 %v556, %v555
        %573 = vmatprep.subr.bf16.mxu0 0
        %574 = vmatpush1.bf16.msra.mxu0 %v517
        %575 = vmatprep.subr.bf16.mxu0 0
        %576 = vmatpush1.bf16.msra.mxu0 %v516
        %577 = vmatprep.subr.bf16.mxu0 0
        %578 = vmatpush1.bf16.msra.mxu0 %v515
        %579 = vmatprep.subr.bf16.mxu0 0
        %580 = vmatpush1.bf16.msra.mxu0 %v514
        %581 = vmatprep.subr.bf16.mxu0 0
        %582 = vmatpush1.bf16.msra.mxu0 %v513
        %583 = vmatprep.subr.bf16.mxu0 0
        %584 = vmatpush1.bf16.msra.mxu0 %v512
        %585 = vmatprep.subr.bf16.mxu0 0
        %586 = vmatpush1.bf16.msra.mxu0 %v511
        %587 = vmatprep.subr.bf16.mxu0 0
        %588 = vmatpush1.bf16.msra.mxu0 %v510
        %589 = vmatprep.subr.bf16.mxu0 0
        %590 = vmatpush2.bf16.msra.mxu0 0
        %591 = vmatprep.subr.bf16.mxu0 0
        %592 = vmatpush2.bf16.msra.mxu0 0
        %593 = vmatprep.subr.bf16.mxu0 0
        %594 = vmatpush2.bf16.msra.mxu0 0
        %595 = vmatprep.subr.bf16.mxu0 0
        %596 = vmatpush2.bf16.msra.mxu0 0
        %597 = vmatprep.subr.bf16.mxu0 0
        %598 = vmatpush2.bf16.msra.mxu0 0
        %599 = vmatprep.subr.bf16.mxu0 0
        %600 = vmatpush2.bf16.msra.mxu0 0
        %601 = vmatprep.subr.bf16.mxu0 0
        %602 = vmatpush2.bf16.msra.mxu0 0
        %603 = vmatprep.subr.bf16.mxu0 0
        %604 = vmatpush2.bf16.msra.mxu0 0
        %605 = vmatprep.mubr.bf16.mxu0 0
        %606 = vmatmul.mubr.bf16.gmra.mxu0 %v557
        %v607 = vpop.f32.mrf.mxu0
        %v608 = vadd.f32 %v523, %v607
        %v609 = vpop.f32.mrf.mxu0
        %v610 = vpop.f32.mrf.mxu0
        %v611 = vadd.f32 %v523, %v610
        %v612 = vpop.f32.mrf.mxu0
        %613 = vmatprep.mubr.bf16.mxu0 0
        %614 = vmatmul.mubr.bf16.gmra.mxu0 %v558
        %v615 = vpop.f32.mrf.mxu0
        %v616 = vadd.f32 %v523, %v615
        %v617 = vpop.f32.mrf.mxu0
        %v618 = vpop.f32.mrf.mxu0
        %v619 = vadd.f32 %v523, %v618
        %v620 = vpop.f32.mrf.mxu0
        %621 = vmatprep.mubr.bf16.mxu0 0
        %622 = vmatmul.mubr.bf16.gmra.mxu0 %v559
        %v623 = vpop.f32.mrf.mxu0
        %v624 = vadd.f32 %v523, %v623
        %v625 = vpop.f32.mrf.mxu0
        %v626 = vpop.f32.mrf.mxu0
        %v627 = vadd.f32 %v523, %v626
        %v628 = vpop.f32.mrf.mxu0
        %629 = vmatprep.mubr.bf16.mxu0 0
        %630 = vmatmul.mubr.bf16.gmra.mxu0 %v560
        %v631 = vpop.f32.mrf.mxu0
        %v632 = vadd.f32 %v523, %v631
        %v633 = vpop.f32.mrf.mxu0
        %v634 = vpop.f32.mrf.mxu0
        %v635 = vadd.f32 %v523, %v634
        %v636 = vpop.f32.mrf.mxu0
        %637 = vmatprep.mubr.bf16.mxu0 0
        %638 = vmatmul.mubr.bf16.gmra.mxu0 %v561
        %v639 = vpop.f32.mrf.mxu0
        %v640 = vadd.f32 %v523, %v639
        %v641 = vpop.f32.mrf.mxu0
        %v642 = vpop.f32.mrf.mxu0
        %v643 = vadd.f32 %v523, %v642
        %v644 = vpop.f32.mrf.mxu0
        %645 = vmatprep.mubr.bf16.mxu0 0
        %646 = vmatmul.mubr.bf16.gmra.mxu0 %v562
        %v647 = vpop.f32.mrf.mxu0
        %v648 = vadd.f32 %v523, %v647
        %v649 = vpop.f32.mrf.mxu0
        %v650 = vpop.f32.mrf.mxu0
        %v651 = vadd.f32 %v523, %v650
        %v652 = vpop.f32.mrf.mxu0
        %653 = vmatprep.mubr.bf16.mxu0 0
        %654 = vmatmul.mubr.bf16.gmra.mxu0 %v563
        %v655 = vpop.f32.mrf.mxu0
        %v656 = vadd.f32 %v523, %v655
        %v657 = vpop.f32.mrf.mxu0
        %v658 = vpop.f32.mrf.mxu0
        %v659 = vadd.f32 %v523, %v658
        %v660 = vpop.f32.mrf.mxu0
        %661 = vmatprep.mubr.bf16.mxu0 0
        %662 = vmatmul.mubr.bf16.gmra.mxu0 %v564
        %v663 = vpop.f32.mrf.mxu0
        %v664 = vadd.f32 %v523, %v663
        %v665 = vpop.f32.mrf.mxu0
        %v666 = vpop.f32.mrf.mxu0
        %v667 = vadd.f32 %v523, %v666
        %v668 = vpop.f32.mrf.mxu0
        %669 = vdwg.mxu0
        %v670 = vmax.f32 %v608, 0.0
        %v671 = vmax.f32 %v611, 0.0
        %v672 = vmax.f32 %v616, 0.0
        %v673 = vmax.f32 %v619, 0.0
        %v674 = vmax.f32 %v624, 0.0
        %v675 = vmax.f32 %v627, 0.0
        %v676 = vmax.f32 %v632, 0.0
        %v677 = vmax.f32 %v635, 0.0
        %v678 = vmax.f32 %v640, 0.0
        %v679 = vmax.f32 %v643, 0.0
        %v680 = vmax.f32 %v648, 0.0
        %v681 = vmax.f32 %v651, 0.0
        %v682 = vmax.f32 %v656, 0.0
        %v683 = vmax.f32 %v659, 0.0
        %v684 = vmax.f32 %v664, 0.0
        %v685 = vmax.f32 %v667, 0.0
        %v686 = vpack.c.bf16 %v671, %v670
        %v687 = vpack.c.bf16 %v673, %v672
        %v688 = vpack.c.bf16 %v675, %v674
        %v689 = vpack.c.bf16 %v677, %v676
        %v690 = vpack.c.bf16 %v679, %v678
        %v691 = vpack.c.bf16 %v681, %v680
        %v692 = vpack.c.bf16 %v683, %v682
        %v693 = vpack.c.bf16 %v685, %v684
        %v694 = vld [vmem:[%s4] sm:$0xf]
        %v695 = vld [vmem:[%s4 + $0x4] sm:$0xf]
        %v696 = vld [vmem:[%s4 + $0x8] sm:$0xf]
        %v697 = vld [vmem:[%s4 + $0xc] sm:$0xf]
        %v702 = vunpack.c.l.b16 %v694
        %v703 = vunpack.c.l.b16 %v695
        %v704 = vunpack.c.l.b16 %v696
        %v705 = vunpack.c.l.b16 %v697
        %v706 = vpack.c.b16 %v703, %v702
        %v707 = vpack.c.b16 %v705, %v704
        %vm710 = vcmask 261120
        %v712 = vsel %vm710, %v686, 0
        %v715 = vsel %vm710, %v687, 0
        %v718 = vsel %vm710, %v688, 0
        %v721 = vsel %vm710, %v689, 0
        %v724 = vsel %vm710, %v690, 0
        %v727 = vsel %vm710, %v691, 0
        %v730 = vsel %vm710, %v692, 0
        %v733 = vsel %vm710, %v693, 0
        %735 = vmatprep.subr.bf16.mxu0 0
        %736 = vmatpush1.bf16.msra.mxu0 0
        %737 = vmatprep.subr.bf16.mxu0 0
        %738 = vmatpush1.bf16.msra.mxu0 0
        %739 = vmatprep.subr.bf16.mxu0 0
        %740 = vmatpush1.bf16.msra.mxu0 0
        %741 = vmatprep.subr.bf16.mxu0 0
        %742 = vmatpush1.bf16.msra.mxu0 0
        %743 = vmatprep.subr.bf16.mxu0 0
        %744 = vmatpush1.bf16.msra.mxu0 0
        %745 = vmatprep.subr.bf16.mxu0 0
        %746 = vmatpush1.bf16.msra.mxu0 0
        %747 = vmatprep.subr.bf16.mxu0 0
        %748 = vmatpush1.bf16.msra.mxu0 %v707
        %749 = vmatprep.subr.bf16.mxu0 0
        %750 = vmatpush1.bf16.msra.mxu0 %v706
        %751 = vmatprep.subr.bf16.mxu0 0
        %752 = vmatpush2.bf16.msra.mxu0 0
        %753 = vmatprep.subr.bf16.mxu0 0
        %754 = vmatpush2.bf16.msra.mxu0 0
        %755 = vmatprep.subr.bf16.mxu0 0
        %756 = vmatpush2.bf16.msra.mxu0 0
        %757 = vmatprep.subr.bf16.mxu0 0
        %758 = vmatpush2.bf16.msra.mxu0 0
        %759 = vmatprep.subr.bf16.mxu0 0
        %760 = vmatpush2.bf16.msra.mxu0 0
        %761 = vmatprep.subr.bf16.mxu0 0
        %762 = vmatpush2.bf16.msra.mxu0 0
        %763 = vmatprep.subr.bf16.mxu0 0
        %764 = vmatpush2.bf16.msra.mxu0 0
        %765 = vmatprep.subr.bf16.mxu0 0
        %766 = vmatpush2.bf16.msra.mxu0 0
        %767 = vmatprep.mubr.bf16.mxu0 0
        %768 = vmatmul.mubr.bf16.gmra.mxu0 %v712
        %v769 = vpop.f32.mrf.mxu0
        %v770 = vadd.f32 0.0, %v769
        %v771 = vpop.f32.mrf.mxu0
        %v772 = vpop.f32.mrf.mxu0
        %v773 = vadd.f32 0.0, %v772
        %v774 = vpop.f32.mrf.mxu0
        %775 = vmatprep.mubr.bf16.mxu0 0
        %776 = vmatmul.mubr.bf16.gmra.mxu0 %v715
        %v777 = vpop.f32.mrf.mxu0
        %v778 = vadd.f32 0.0, %v777
        %v779 = vpop.f32.mrf.mxu0
        %v780 = vpop.f32.mrf.mxu0
        %v781 = vadd.f32 0.0, %v780
        %v782 = vpop.f32.mrf.mxu0
        %783 = vmatprep.mubr.bf16.mxu0 0
        %784 = vmatmul.mubr.bf16.gmra.mxu0 %v718
        %v785 = vpop.f32.mrf.mxu0
        %v786 = vadd.f32 0.0, %v785
        %v787 = vpop.f32.mrf.mxu0
        %v788 = vpop.f32.mrf.mxu0
        %v789 = vadd.f32 0.0, %v788
        %v790 = vpop.f32.mrf.mxu0
        %791 = vmatprep.mubr.bf16.mxu0 0
        %792 = vmatmul.mubr.bf16.gmra.mxu0 %v721
        %v793 = vpop.f32.mrf.mxu0
        %v794 = vadd.f32 0.0, %v793
        %v795 = vpop.f32.mrf.mxu0
        %v796 = vpop.f32.mrf.mxu0
        %v797 = vadd.f32 0.0, %v796
        %v798 = vpop.f32.mrf.mxu0
        %799 = vmatprep.mubr.bf16.mxu0 0
        %800 = vmatmul.mubr.bf16.gmra.mxu0 %v724
        %v801 = vpop.f32.mrf.mxu0
        %v802 = vadd.f32 0.0, %v801
        %v803 = vpop.f32.mrf.mxu0
        %v804 = vpop.f32.mrf.mxu0
        %v805 = vadd.f32 0.0, %v804
        %v806 = vpop.f32.mrf.mxu0
        %807 = vmatprep.mubr.bf16.mxu0 0
        %808 = vmatmul.mubr.bf16.gmra.mxu0 %v727
        %v809 = vpop.f32.mrf.mxu0
        %v810 = vadd.f32 0.0, %v809
        %v811 = vpop.f32.mrf.mxu0
        %v812 = vpop.f32.mrf.mxu0
        %v813 = vadd.f32 0.0, %v812
        %v814 = vpop.f32.mrf.mxu0
        %815 = vmatprep.mubr.bf16.mxu0 0
        %816 = vmatmul.mubr.bf16.gmra.mxu0 %v730
        %v817 = vpop.f32.mrf.mxu0
        %v818 = vadd.f32 0.0, %v817
        %v819 = vpop.f32.mrf.mxu0
        %v820 = vpop.f32.mrf.mxu0
        %v821 = vadd.f32 0.0, %v820
        %v822 = vpop.f32.mrf.mxu0
        %823 = vmatprep.mubr.bf16.mxu0 0
        %824 = vmatmul.mubr.bf16.gmra.mxu0 %v733
        %v825 = vpop.f32.mrf.mxu0
        %v826 = vadd.f32 0.0, %v825
        %v827 = vpop.f32.mrf.mxu0
        %v828 = vpop.f32.mrf.mxu0
        %v829 = vadd.f32 0.0, %v828
        %v830 = vpop.f32.mrf.mxu0
        %831 = vdwg.mxu0
        %v832 = vpack.c.bf16 %v773, %v770
        %v833 = vpack.c.bf16 %v781, %v778
        %v834 = vpack.c.bf16 %v789, %v786
        %v835 = vpack.c.bf16 %v797, %v794
        %v836 = vpack.c.bf16 %v805, %v802
        %v837 = vpack.c.bf16 %v813, %v810
        %v838 = vpack.c.bf16 %v821, %v818
        %v839 = vpack.c.bf16 %v829, %v826
        %v840 = vld [vmem:[%s5] sm:$0x1]
        %v842 = vlaneseq
        %v843 = vshrl.u32 %v842, 7
        %v844 = vsub.s32 0, %v843
        %v845 = vrot.slane %v840, %v844
        %847 = vmatprep.subr.bf16.mxu0 0
        %848 = vmatpush1.bf16.msra.mxu0 %v839
        %849 = vmatprep.subr.bf16.mxu0 0
        %850 = vmatpush1.bf16.msra.mxu0 %v838
        %851 = vmatprep.subr.bf16.mxu0 0
        %852 = vmatpush1.bf16.msra.mxu0 %v837
        %853 = vmatprep.subr.bf16.mxu0 0
        %854 = vmatpush1.bf16.msra.mxu0 %v836
        %855 = vmatprep.subr.bf16.mxu0 0
        %856 = vmatpush1.bf16.msra.mxu0 %v835
        %857 = vmatprep.subr.bf16.mxu0 0
        %858 = vmatpush1.bf16.msra.mxu0 %v834
        %859 = vmatprep.subr.bf16.mxu0 0
        %860 = vmatpush1.bf16.msra.mxu0 %v833
        %861 = vmatprep.subr.bf16.mxu0 0
        %862 = vmatpush1.bf16.msra.mxu0 %v832
        %863 = vmatprep.subr.bf16.mxu0 0
        %864 = vmatpush2.bf16.msra.mxu0 0
        %865 = vmatprep.subr.bf16.mxu0 0
        %866 = vmatpush2.bf16.msra.mxu0 0
        %867 = vmatprep.subr.bf16.mxu0 0
        %868 = vmatpush2.bf16.msra.mxu0 0
        %869 = vmatprep.subr.bf16.mxu0 0
        %870 = vmatpush2.bf16.msra.mxu0 0
        %871 = vmatprep.subr.bf16.mxu0 0
        %872 = vmatpush2.bf16.msra.mxu0 0
        %873 = vmatprep.subr.bf16.mxu0 0
        %874 = vmatpush2.bf16.msra.mxu0 0
        %875 = vmatprep.subr.bf16.mxu0 0
        %876 = vmatpush2.bf16.msra.mxu0 0
        %877 = vmatprep.subr.bf16.mxu0 0
        %878 = vmatpush2.bf16.msra.mxu0 0
        %879 = vmatprep.mubr.bf16.mxu0 0
        %880 = vmatmul.mubr.bf16.gmra.mxu0 %v557
        %v881 = vpop.f32.mrf.mxu0
        %v882 = vadd.f32 %v845, %v881
        %v883 = vpop.f32.mrf.mxu0
        %v884 = vpop.f32.mrf.mxu0
        %v885 = vadd.f32 %v845, %v884
        %v886 = vpop.f32.mrf.mxu0
        %887 = vmatprep.mubr.bf16.mxu0 0
        %888 = vmatmul.mubr.bf16.gmra.mxu0 %v558
        %v889 = vpop.f32.mrf.mxu0
        %v890 = vadd.f32 %v845, %v889
        %v891 = vpop.f32.mrf.mxu0
        %v892 = vpop.f32.mrf.mxu0
        %v893 = vadd.f32 %v845, %v892
        %v894 = vpop.f32.mrf.mxu0
        %895 = vmatprep.mubr.bf16.mxu0 0
        %896 = vmatmul.mubr.bf16.gmra.mxu0 %v559
        %v897 = vpop.f32.mrf.mxu0
        %v898 = vadd.f32 %v845, %v897
        %v899 = vpop.f32.mrf.mxu0
        %v900 = vpop.f32.mrf.mxu0
        %v901 = vadd.f32 %v845, %v900
        %v902 = vpop.f32.mrf.mxu0
        %903 = vmatprep.mubr.bf16.mxu0 0
        %904 = vmatmul.mubr.bf16.gmra.mxu0 %v560
        %v905 = vpop.f32.mrf.mxu0
        %v906 = vadd.f32 %v845, %v905
        %v907 = vpop.f32.mrf.mxu0
        %v908 = vpop.f32.mrf.mxu0
        %v909 = vadd.f32 %v845, %v908
        %v910 = vpop.f32.mrf.mxu0
        %911 = vmatprep.mubr.bf16.mxu0 0
        %912 = vmatmul.mubr.bf16.gmra.mxu0 %v561
        %v913 = vpop.f32.mrf.mxu0
        %v914 = vadd.f32 %v845, %v913
        %v915 = vpop.f32.mrf.mxu0
        %v916 = vpop.f32.mrf.mxu0
        %v917 = vadd.f32 %v845, %v916
        %v918 = vpop.f32.mrf.mxu0
        %919 = vmatprep.mubr.bf16.mxu0 0
        %920 = vmatmul.mubr.bf16.gmra.mxu0 %v562
        %v921 = vpop.f32.mrf.mxu0
        %v922 = vadd.f32 %v845, %v921
        %v923 = vpop.f32.mrf.mxu0
        %v924 = vpop.f32.mrf.mxu0
        %v925 = vadd.f32 %v845, %v924
        %v926 = vpop.f32.mrf.mxu0
        %927 = vmatprep.mubr.bf16.mxu0 0
        %928 = vmatmul.mubr.bf16.gmra.mxu0 %v563
        %v929 = vpop.f32.mrf.mxu0
        %v930 = vadd.f32 %v845, %v929
        %v931 = vpop.f32.mrf.mxu0
        %v932 = vpop.f32.mrf.mxu0
        %v933 = vadd.f32 %v845, %v932
        %v934 = vpop.f32.mrf.mxu0
        %935 = vmatprep.mubr.bf16.mxu0 0
        %936 = vmatmul.mubr.bf16.gmra.mxu0 %v564
        %v937 = vpop.f32.mrf.mxu0
        %v938 = vadd.f32 %v845, %v937
        %v939 = vpop.f32.mrf.mxu0
        %v940 = vpop.f32.mrf.mxu0
        %v941 = vadd.f32 %v845, %v940
        %v942 = vpop.f32.mrf.mxu0
        %943 = vdwg.mxu0
        %v944 = vmax.f32 %v882, 0.0
        %v945 = vmax.f32 %v885, 0.0
        %v946 = vmax.f32 %v890, 0.0
        %v947 = vmax.f32 %v893, 0.0
        %v948 = vmax.f32 %v898, 0.0
        %v949 = vmax.f32 %v901, 0.0
        %v950 = vmax.f32 %v906, 0.0
        %v951 = vmax.f32 %v909, 0.0
        %v952 = vmax.f32 %v914, 0.0
        %v953 = vmax.f32 %v917, 0.0
        %v954 = vmax.f32 %v922, 0.0
        %v955 = vmax.f32 %v925, 0.0
        %v956 = vmax.f32 %v930, 0.0
        %v957 = vmax.f32 %v933, 0.0
        %v958 = vmax.f32 %v938, 0.0
        %v959 = vmax.f32 %v941, 0.0
        %vm960 = vcmask 130048
        %961 = vst.msk [vmem:[%s308] sm:$0xff] %vm960, %v944
        %962 = vst.msk [vmem:[%s308 + $0x8] sm:$0xff] %vm960, %v945
        %963 = vst.msk [vmem:[%s308 + $0x10] sm:$0xff] %vm960, %v946
        %964 = vst.msk [vmem:[%s308 + $0x18] sm:$0xff] %vm960, %v947
        %965 = vst.msk [vmem:[%s308 + $0x20] sm:$0xff] %vm960, %v948
        %966 = vst.msk [vmem:[%s308 + $0x28] sm:$0xff] %vm960, %v949
        %967 = vst.msk [vmem:[%s308 + $0x30] sm:$0xff] %vm960, %v950
        %968 = vst.msk [vmem:[%s308 + $0x38] sm:$0xff] %vm960, %v951
        %969 = vst.msk [vmem:[%s308 + $0x40] sm:$0xff] %vm960, %v952
        %970 = vst.msk [vmem:[%s308 + $0x48] sm:$0xff] %vm960, %v953
        %971 = vst.msk [vmem:[%s308 + $0x50] sm:$0xff] %vm960, %v954
        %972 = vst.msk [vmem:[%s308 + $0x58] sm:$0xff] %vm960, %v955
        %973 = vst.msk [vmem:[%s308 + $0x60] sm:$0xff] %vm960, %v956
        %974 = vst.msk [vmem:[%s308 + $0x68] sm:$0xff] %vm960, %v957
        %975 = vst.msk [vmem:[%s308 + $0x70] sm:$0xff] %vm960, %v958
        %976 = vst.msk [vmem:[%s308 + $0x78] sm:$0xff] %vm960, %v959
        %v977 = vpack.c.bf16 %v945, %v944
        %v978 = vpack.c.bf16 %v947, %v946
        %v979 = vpack.c.bf16 %v949, %v948
        %v980 = vpack.c.bf16 %v951, %v950
        %v981 = vpack.c.bf16 %v953, %v952
        %v982 = vpack.c.bf16 %v955, %v954
        %v983 = vpack.c.bf16 %v957, %v956
        %v984 = vpack.c.bf16 %v959, %v958
        %v986 = vsel %vm960, 1065369472, 0
        %v989 = vsel %vm960, %v977, 0
        %v992 = vsel %vm960, %v978, 0
        %v995 = vsel %vm960, %v979, 0
        %v998 = vsel %vm960, %v980, 0
        %v1001 = vsel %vm960, %v981, 0
        %v1004 = vsel %vm960, %v982, 0
        %v1007 = vsel %vm960, %v983, 0
        %v1010 = vsel %vm960, %v984, 0
        %1012 = vmatprep.subr.bf16.mxu0 0
        %1013 = vmatpush1.bf16.xpose.msra.mxu0 %v1010
        %1014 = vmatprep.subr.bf16.mxu0 0
        %1015 = vmatpush1.bf16.xpose.msra.mxu0 %v1007
        %1016 = vmatprep.subr.bf16.mxu0 0
        %1017 = vmatpush1.bf16.xpose.msra.mxu0 %v1004
        %1018 = vmatprep.subr.bf16.mxu0 0
        %1019 = vmatpush1.bf16.xpose.msra.mxu0 %v1001
        %1020 = vmatprep.subr.bf16.mxu0 0
        %1021 = vmatpush1.bf16.xpose.msra.mxu0 %v998
        %1022 = vmatprep.subr.bf16.mxu0 0
        %1023 = vmatpush1.bf16.xpose.msra.mxu0 %v995
        %1024 = vmatprep.subr.bf16.mxu0 0
        %1025 = vmatpush1.bf16.xpose.msra.mxu0 %v992
        %1026 = vmatprep.subr.bf16.mxu0 0
        %1027 = vmatpush1.bf16.xpose.msra.mxu0 %v989
        %1028 = vmatprep.subr.bf16.mxu0 0
        %1029 = vmatpush2.bf16.xpose.msra.mxu0 0
        %1030 = vmatprep.subr.bf16.mxu0 0
        %1031 = vmatpush2.bf16.xpose.msra.mxu0 0
        %1032 = vmatprep.subr.bf16.mxu0 0
        %1033 = vmatpush2.bf16.xpose.msra.mxu0 0
        %1034 = vmatprep.subr.bf16.mxu0 0
        %1035 = vmatpush2.bf16.xpose.msra.mxu0 0
        %1036 = vmatprep.subr.bf16.mxu0 0
        %1037 = vmatpush2.bf16.xpose.msra.mxu0 0
        %1038 = vmatprep.subr.bf16.mxu0 0
        %1039 = vmatpush2.bf16.xpose.msra.mxu0 0
        %1040 = vmatprep.subr.bf16.mxu0 0
        %1041 = vmatpush2.bf16.xpose.msra.mxu0 0
        %1042 = vmatprep.subr.bf16.mxu0 0
        %1043 = vmatpush2.bf16.xpose.msra.mxu0 0
        %1044 = vmatprep.mubr.bf16.mxu0 0
        %1045 = vmatmul.mubr.bf16.gmra.mxu0 %v986
        %v1046 = vpop.f32.mrf.mxu0
        %v1047 = vadd.f32 0.0, %v1046
        %v1048 = vpop.f32.mrf.mxu0
        %v1049 = vpop.f32.mrf.mxu0
        %v1050 = vpop.f32.mrf.mxu0
        %1051 = vdwg.mxu0
        %1052 = vst [vmem:[%s286] sm:$0x1] %v1047
        %s1053 = sand.u32 %s166, 1
        %s1054 = scalar_lea.sflag [#allocation3], %s1053
        %s1055 = sand.u32 %s166, 1
        %s1056 = scalar_lea.vmem [#allocation2], %s1055
        %p1057 = scmp.lt.s32.totalorder %s22, 1
        %s1058 = scalar_select %p1057, %s22, 1
        %s1059 = smul.addr %s1058, 16
        %s1060 = smul.addr %s1059, 8
        %s1061 = scalar_lea.vmem %s7, %s1060
        // Predicated region
        $region45: #{tpu_custom_call.1} parent=43 // pred_check
          %p1062 = pneg %p176
        $region46: #{tpu_custom_call.1} parent=43 // pred_check_branch
          %1064 = sbr.rel (%p1062) target = $region48
        $region47: #{tpu_custom_call.1} parent=43 // pred_region
          %s1066 = ssub.s32 16, 16
          %1067 = vsyncadd %s1054, %s1066
          %s1068 = smul.addr %s22, 16
          %s1069 = scalar_lea.hbm %s6, %s1068
          %s1071 = sshll.u32 %s1056, 4
          %s1072 = int_to_ptr.vmem [resolvable:$true] %s1071
          %1074 = dma.vmem_to_hbm [thread:$0]  %s1072, 16, %s1069, %s1054
        $region48: #{tpu_custom_call.1} parent=43 // pred_fallthru
          _
        // Predicated region
        $region49: #{tpu_custom_call.1} parent=43 // pred_check
          %p1075 = pneg %p202
        $region50: #{tpu_custom_call.1} parent=43 // pred_check_branch
          %1077 = sbr.rel (%p1075) target = $region52
        $region51: #{tpu_custom_call.1} parent=43 // pred_region
          _
        $region52: #{tpu_custom_call.1} parent=43 // pred_fallthru
          _
      $region44: #{tpu_custom_call.1} parent=5 // pred_fallthru
        _
      %p1078 = scmp.le.s32.totalorder 2, %s17
      // Predicated region
      $region53: #{tpu_custom_call.1} parent=5 // pred_check
        %p1079 = pneg %p1078
      $region54: #{tpu_custom_call.1} parent=5 // pred_check_branch
        %1081 = sbr.rel (%p1079) target = $region56
      $region55: #{tpu_custom_call.1} parent=5 // pred_region
        %s1082 = ssub.s32 %s17, 2
        // Predicated region
        $region57: #{tpu_custom_call.1} parent=55 // pred_check
          %p1083 = pneg %p182
        $region58: #{tpu_custom_call.1} parent=55 // pred_check_branch
          %1085 = sbr.rel (%p1083) target = $region60
        $region59: #{tpu_custom_call.1} parent=55 // pred_region
          %s1086 = sand.u32 %s167, 1
          %s1087 = scalar_lea.sflag [#allocation3], %s1086
          %s1088 = sand.u32 %s167, 1
          %s1089 = scalar_lea.vmem [#allocation2], %s1088
          %1090 = dma.done %s1087, 16
        $region60: #{tpu_custom_call.1} parent=55 // pred_fallthru
          _
        // Predicated region
        $region61: #{tpu_custom_call.1} parent=55 // pred_check
          %p1091 = pneg %p208
        $region62: #{tpu_custom_call.1} parent=55 // pred_check_branch
          %1093 = sbr.rel (%p1091) target = $region64
        $region63: #{tpu_custom_call.1} parent=55 // pred_region
          %p1094 = scmp.lt.s32.totalorder %s23, 1
          %s1095 = scalar_select %p1094, %s23, 1
          %s1096 = smul.addr %s1095, 16
          %s1097 = smul.addr %s1096, 8
          %s1098 = scalar_lea.vmem %s7, %s1097
        $region64: #{tpu_custom_call.1} parent=55 // pred_fallthru
          _
      $region56: #{tpu_custom_call.1} parent=5 // pred_fallthru
        _
    $region6: #{tpu_custom_call.1} parent=1 // loop_footer
      %s21 = sadd.s32 1, %s17
    $region7: #{tpu_custom_call.1} parent=1 // loop_footer_branch
      %16 = sbr.rel target = $region3
    $region8: #{tpu_custom_call.1} parent=1 // loop_exit
      _
    %1099 = vsyncpa [#allocation3], 1
    %s1100 = scalar_lea.sflag [#allocation3], 1
    %1101 = vsyncpa %s1100, 1

</llo_original>
